<compile_context>
chip_gen: v7x
topology: tpu7x:2x2x1
jax: 0.10.0
libtpu: 0.0.40
codegen_flags: <defaults>
</compile_context>

<pallas_src>
from functools import partial

import jax
import jax.numpy as jnp
from jax.experimental import pallas as pl
from jax.experimental.pallas import tpu as pltpu

LATENT_DIM = 10
HIDDEN_DIM = 32


def _vmem_spec():
    return pl.BlockSpec(memory_space=pltpu.MemorySpace.VMEM)


# ----------------------------------------------------------------------------
# Fused kernel: MLP -> chunk(mu, log_var) -> std -> iwae*mc expansion -> rsample
#   x_ref:   (B, D)      bf16
#   w1_ref:  (D, H)      bf16
#   b1_ref:  (1, H)      f32
#   w2_ref:  (H, 2L)     bf16
#   b2_ref:  (1, 2L)     f32
#   eps_ref: (B, S, L)   f32   (S = iwae_sample_z * mc_sample_z)
# outputs:
#   out_ref: (B, 2L)     f32   raw encoder-network output `_out`
#   zms_ref: (B, S, 3L)  f32   packed [ z | mu_expanded | std_expanded ] on lanes
# ----------------------------------------------------------------------------
def fused_encoder_kernel(x_ref, w1_ref, b1_ref, w2_ref, b2_ref, eps_ref,
                         out_ref, zms_ref):
    # GEMM 1 (bf16 MXU, f32 accumulate) + bias + ReLU in f32.
    h = jnp.dot(x_ref[...], w1_ref[...], preferred_element_type=jnp.float32)
    h = jnp.maximum(h + b1_ref[...], 0.0)
    # GEMM 2 (bf16 MXU, f32 accumulate) + bias.
    o = jnp.dot(h.astype(jnp.bfloat16), w2_ref[...],
                preferred_element_type=jnp.float32) + b2_ref[...]
    out_ref[...] = o.astype(out_ref.dtype)

    B, twoL = o.shape
    L = twoL // 2
    S = eps_ref.shape[1]

    # torch.chunk(_out, 2, dim=-1): first half -> mu, second half -> log_var.
    mu = o[:, :L]                      # (B, L)  static lane slice
    std = jnp.exp(0.5 * o[:, L:])      # (B, L)  EUP exp, f32

    # expand(B, iwae, mc, -1) synthesized in VMEM (sublane broadcast), no HBM.
    mu_b = jnp.broadcast_to(mu[:, None, :], (B, S, L))
    std_b = jnp.broadcast_to(std[:, None, :], (B, S, L))

    # rsample: z = mu + std * eps
    z = mu_b + std_b * eps_ref[...]

    # Packed single store: [z | mu | std] along the lane axis.
    zms_ref[...] = jnp.concatenate([z, mu_b, std_b], axis=-1)


# ----------------------------------------------------------------------------
# Wrapper (glue: flatten / dtype casts / final slices only), fully jitted so
# the pre/post ops fuse around the single pallas_call.
# ----------------------------------------------------------------------------
@partial(jax.jit, static_argnames=("iwae_sample_z", "mc_sample_z"))
def encoder_forward(x, w1, b1, w2, b2, eps, iwae_sample_z=1, mc_sample_z=1):
    B = x.shape[0]
    L = w2.shape[1] // 2
    S = iwae_sample_z * mc_sample_z

    x_flat = x.reshape(B, -1).astype(jnp.bfloat16)
    w1_bf = w1.astype(jnp.bfloat16)
    w2_bf = w2.astype(jnp.bfloat16)
    b1_f32 = b1.astype(jnp.float32)
    b2_f32 = b2.astype(jnp.float32)
    eps_r = eps.reshape(B, S, L).astype(jnp.float32)

    out, zms = pl.pallas_call(
        fused_encoder_kernel,
        out_shape=(
            jax.ShapeDtypeStruct((B, 2 * L), jnp.float32),
            jax.ShapeDtypeStruct((B, S, 3 * L), jnp.float32),
        ),
        in_specs=[_vmem_spec()] * 6,
        out_specs=(_vmem_spec(), _vmem_spec()),
    )(x_flat, w1_bf, b1_f32, w2_bf, b2_f32, eps_r)

    z = zms[..., 0 * L:1 * L].reshape(B, iwae_sample_z, mc_sample_z, L)
    mu_exp = zms[..., 1 * L:2 * L].reshape(B, iwae_sample_z, mc_sample_z, L)
    std_exp = zms[..., 2 * L:3 * L].reshape(B, iwae_sample_z, mc_sample_z, L)

    # dist_expanded (a torch.distributions.Normal) is represented by its params.
    # TODO(synk): a Distribution object itself has no Pallas equivalent; we return (mu, std).
    return out, z, (mu_exp, std_exp)


if __name__ == "__main__":
    key = jax.random.PRNGKey(0)
    k_x, k_w1, k_w2, k_eps = jax.random.split(key, 4)

    B, C, H, W = 2, 4, 16, 16
    D = C * H * W
    iwae, mc = 2, 3

    # Deterministic example input (NCHW) and parameters.
    x = jax.random.normal(k_x, (B, C, H, W), dtype=jnp.float32)
    w1 = jax.random.normal(k_w1, (D, HIDDEN_DIM), dtype=jnp.float32) * (1.0 / jnp.sqrt(D))
    b1 = jnp.zeros((1, HIDDEN_DIM), dtype=jnp.float32)
    w2 = jax.random.normal(k_w2, (HIDDEN_DIM, 2 * LATENT_DIM), dtype=jnp.float32) * (
        1.0 / jnp.sqrt(HIDDEN_DIM)
    )
    b2 = jnp.zeros((1, 2 * LATENT_DIM), dtype=jnp.float32)

    # Deterministic standard-normal noise for rsample.
    eps = jax.random.normal(k_eps, (B, iwae, mc, LATENT_DIM), dtype=jnp.float32)

    out, z, (mu_exp, std_exp) = encoder_forward(
        x, w1, b1, w2, b2, eps, iwae_sample_z=iwae, mc_sample_z=mc
    )
    jax.block_until_ready((out, z, mu_exp, std_exp))

    assert out.shape == (B, 2 * LATENT_DIM)
    assert z.shape == (B, iwae, mc, LATENT_DIM)
    assert mu_exp.shape == (B, iwae, mc, LATENT_DIM)
    assert std_exp.shape == (B, iwae, mc, LATENT_DIM)

    # Pure-JAX reference with the SAME bf16-matmul / f32-accumulate recipe.
    xb = x.reshape(B, -1).astype(jnp.bfloat16)
    h_ref = jnp.maximum(
        jnp.dot(xb, w1.astype(jnp.bfloat16), preferred_element_type=jnp.float32) + b1, 0.0
    )
    ref_out = (
        jnp.dot(h_ref.astype(jnp.bfloat16), w2.astype(jnp.bfloat16),
                preferred_element_type=jnp.float32) + b2
    )
    ref_mu, ref_logvar = jnp.split(ref_out, 2, axis=-1)
    ref_std = jnp.exp(0.5 * ref_logvar)
    ref_z = ref_mu[:, None, None, :] + ref_std[:, None, None, :] * eps

    assert jnp.allclose(out, ref_out, atol=1e-2, rtol=1e-2)
    assert jnp.allclose(z, ref_z, atol=1e-2, rtol=1e-2)
    assert jnp.allclose(mu_exp, jnp.broadcast_to(ref_mu[:, None, None, :], mu_exp.shape),
                        atol=1e-2, rtol=1e-2)
    assert jnp.allclose(std_exp, jnp.broadcast_to(ref_std[:, None, None, :], std_exp.shape),
                        atol=1e-2, rtol=1e-2)

    print("KERNEL_OK")
</pallas_src>

<mosaic_0001>
module attributes {stable_mosaic.version = 11 : i64} {
  func.func @fused_encoder_kernel(%arg0: memref<2x1024xbf16, #tpu.memory_space<vmem>>, %arg1: memref<1024x32xbf16, #tpu.memory_space<vmem>>, %arg2: memref<1x32xf32, #tpu.memory_space<vmem>>, %arg3: memref<32x20xbf16, #tpu.memory_space<vmem>>, %arg4: memref<1x20xf32, #tpu.memory_space<vmem>>, %arg5: memref<2x6x10xf32, #tpu.memory_space<vmem>>, %arg6: memref<2x20xf32, #tpu.memory_space<vmem>>, %arg7: memref<2x6x30xf32, #tpu.memory_space<vmem>>) attributes {dimension_semantics = [], scalar_prefetch = 0 : i64, scratch_operands = 0 : i64, tpu.core_type = #tpu.core_type<tc>} {
    %c0 = arith.constant 0 : index
    %c0_0 = arith.constant 0 : index
    %0 = vector.load %arg0[%c0, %c0_0] : memref<2x1024xbf16, #tpu.memory_space<vmem>>, vector<2x1024xbf16>
    %c0_1 = arith.constant 0 : index
    %c0_2 = arith.constant 0 : index
    %1 = vector.load %arg1[%c0_1, %c0_2] : memref<1024x32xbf16, #tpu.memory_space<vmem>>, vector<1024x32xbf16>
    %cst = arith.constant dense<0.000000e+00> : vector<2x32xf32>
    %2 = tpu.matmul %0, %1, %cst {dimension_numbers = #tpu.dot_dimension_numbers<[1], [0], [0], [1], [0, 0, 1, 1], [], []>} : vector<2x1024xbf16>, vector<1024x32xbf16>, vector<2x32xf32> -> vector<2x32xf32>
    %c0_3 = arith.constant 0 : index
    %c0_4 = arith.constant 0 : index
    %3 = vector.load %arg2[%c0_3, %c0_4] : memref<1x32xf32, #tpu.memory_space<vmem>>, vector<1x32xf32>
    %4 = vector.broadcast %3 : vector<1x32xf32> to vector<2x32xf32>
    %5 = arith.addf %2, %4 : vector<2x32xf32>
    %cst_5 = arith.constant 0.000000e+00 : f32
    %6 = vector.broadcast %cst_5 : f32 to vector<2x32xf32>
    %7 = arith.maximumf %5, %6 : vector<2x32xf32>
    %8 = arith.truncf %7 : vector<2x32xf32> to vector<2x32xbf16>
    %c0_6 = arith.constant 0 : index
    %c0_7 = arith.constant 0 : index
    %9 = vector.load %arg3[%c0_6, %c0_7] : memref<32x20xbf16, #tpu.memory_space<vmem>>, vector<32x20xbf16>
    %cst_8 = arith.constant dense<0.000000e+00> : vector<2x20xf32>
    %10 = tpu.matmul %8, %9, %cst_8 {dimension_numbers = #tpu.dot_dimension_numbers<[1], [0], [0], [1], [0, 0, 1, 1], [], []>} : vector<2x32xbf16>, vector<32x20xbf16>, vector<2x20xf32> -> vector<2x20xf32>
    %c0_9 = arith.constant 0 : index
    %c0_10 = arith.constant 0 : index
    %11 = vector.load %arg4[%c0_9, %c0_10] : memref<1x20xf32, #tpu.memory_space<vmem>>, vector<1x20xf32>
    %12 = vector.broadcast %11 : vector<1x20xf32> to vector<2x20xf32>
    %13 = arith.addf %10, %12 : vector<2x20xf32>
    %c0_11 = arith.constant 0 : index
    %c0_12 = arith.constant 0 : index
    %14 = vector.load %arg6[%c0_11, %c0_12] : memref<2x20xf32, #tpu.memory_space<vmem>>, vector<2x20xf32>
    tpu.vector_store %arg6[%c0_11, %c0_12], %13 {strides = array<i32>} : memref<2x20xf32, #tpu.memory_space<vmem>>, vector<2x20xf32>,
    %15 = vector.extract_strided_slice %13 {offsets = [0, 0], sizes = [2, 10], strides = [1, 1]} : vector<2x20xf32> to vector<2x10xf32>
    %16 = vector.extract_strided_slice %13 {offsets = [0, 10], sizes = [2, 10], strides = [1, 1]} : vector<2x20xf32> to vector<2x10xf32>
    %cst_13 = arith.constant 5.000000e-01 : f32
    %17 = vector.broadcast %cst_13 : f32 to vector<2x10xf32>
    %18 = arith.mulf %17, %16 : vector<2x10xf32>
    %19 = math.exp %18 : vector<2x10xf32>
    %20 = vector.shape_cast %15 : vector<2x10xf32> to vector<2x1x10xf32>
    %21 = vector.shape_cast %20 : vector<2x1x10xf32> to vector<2x1x10xf32>
    %22 = vector.broadcast %21 : vector<2x1x10xf32> to vector<2x6x10xf32>
    %23 = vector.shape_cast %19 : vector<2x10xf32> to vector<2x1x10xf32>
    %24 = vector.shape_cast %23 : vector<2x1x10xf32> to vector<2x1x10xf32>
    %25 = vector.broadcast %24 : vector<2x1x10xf32> to vector<2x6x10xf32>
    %c0_14 = arith.constant 0 : index
    %c0_15 = arith.constant 0 : index
    %c0_16 = arith.constant 0 : index
    %26 = vector.load %arg5[%c0_14, %c0_15, %c0_16] : memref<2x6x10xf32, #tpu.memory_space<vmem>>, vector<2x6x10xf32>
    %27 = arith.mulf %25, %26 : vector<2x6x10xf32>
    %28 = arith.addf %22, %27 : vector<2x6x10xf32>
    %29 = tpu.concatenate %28, %22, %25 in 2 : vector<2x6x10xf32>, vector<2x6x10xf32>, vector<2x6x10xf32> -> vector<2x6x30xf32>
    %c0_17 = arith.constant 0 : index
    %c0_18 = arith.constant 0 : index
    %c0_19 = arith.constant 0 : index
    %30 = vector.load %arg7[%c0_17, %c0_18, %c0_19] : memref<2x6x30xf32, #tpu.memory_space<vmem>>, vector<2x6x30xf32>
    tpu.vector_store %arg7[%c0_17, %c0_18, %c0_19], %29 {strides = array<i32>} : memref<2x6x30xf32, #tpu.memory_space<vmem>>, vector<2x6x30xf32>,
    return
  }
}

</mosaic_0001>

<llo_original>
// kernel: encoder_forward.1
$region0: #{encoder_forward.1}
  #allocation0 [shape = 'u32[]', space=smem, size = 0x4, offset = 0x4, fixed_abs, tag = 'smem constant byte address 0x4 - core index']
  #allocation1 [shape = 'u32[144,128]{1,0:T(1,128)}', space=vmem, size = 0x12000, scoped, tag = 'internal scratch']
  %s0 = inlined_call_operand.vmem [shape: bf16[2,1024], index: 0, kind: input, shape index: {}]
  %s1 = inlined_call_operand.vmem [shape: bf16[1024,32], index: 1, kind: input, shape index: {}]
  %s2 = inlined_call_operand.vmem [shape: f32[1,32], index: 2, kind: input, shape index: {}]
  %s3 = inlined_call_operand.vmem [shape: bf16[32,20], index: 3, kind: input, shape index: {}]
  %s4 = inlined_call_operand.vmem [shape: f32[1,20], index: 4, kind: input, shape index: {}]
  %s5 = inlined_call_operand.vmem [shape: f32[2,6,10], index: 5, kind: input, shape index: {}]
  %s6 = inlined_call_operand.hbm [shape: f32[2,20], index: 6, kind: output, shape index: {0}]
  %s7 = inlined_call_operand.vmem [shape: f32[2,6,30], index: 7, kind: output, shape index: {1}]
  %8 = xla_tuple %s6, %s7
  %s9 = sld [smem:[#allocation0]]
  $region42: #{encoder_forward.1} parent=0
    _
  %s11 = ssub.s32 1, %s9
  %s12 = scalar_select 0, %s11, %s9
  $region1: #{encoder_forward.1} parent=0
    #allocation2 [shape = 'u8[1024]{0}', space=vmem, size = 0x400, scoped, tag = 'output window, operand 0, single buffered']
    #allocation3 [shape = 's32[1]{0}', space=sflag, size = 0x4, scoped, tag = 'scoped memory for encoder_forward.1']
    %13 = vsyncpa [#allocation3], 0
    // Predicated region
    $region2: #{encoder_forward.1} parent=1 // pred_check
      _
    $region3: #{encoder_forward.1} parent=1 // pred_check_branch
      %15 = sbr.rel (0) target = $region5
    $region4: #{encoder_forward.1} parent=1 // pred_region
      _
    $region5: #{encoder_forward.1} parent=1 // pred_fallthru
      _
    // Predicated region
    $region6: #{encoder_forward.1} parent=1 // pred_check
      _
    $region7: #{encoder_forward.1} parent=1 // pred_check_branch
      %17 = sbr.rel (0) target = $region9
    $region8: #{encoder_forward.1} parent=1 // pred_region
      _
    $region9: #{encoder_forward.1} parent=1 // pred_fallthru
      _
    // Predicated region
    $region10: #{encoder_forward.1} parent=1 // pred_check
      _
    $region11: #{encoder_forward.1} parent=1 // pred_check_branch
      %19 = sbr.rel (0) target = $region13
    $region12: #{encoder_forward.1} parent=1 // pred_region
      _
    $region13: #{encoder_forward.1} parent=1 // pred_fallthru
      _
    // Predicated region
    $region14: #{encoder_forward.1} parent=1 // pred_check
      _
    $region15: #{encoder_forward.1} parent=1 // pred_check_branch
      %21 = sbr.rel (0) target = $region17
    $region16: #{encoder_forward.1} parent=1 // pred_region
      _
    $region17: #{encoder_forward.1} parent=1 // pred_fallthru
      _
    // Predicated region
    $region18: #{encoder_forward.1} parent=1 // pred_check
      _
    $region19: #{encoder_forward.1} parent=1 // pred_check_branch
      %23 = sbr.rel (0) target = $region21
    $region20: #{encoder_forward.1} parent=1 // pred_region
      _
    $region21: #{encoder_forward.1} parent=1 // pred_fallthru
      _
    // Predicated region
    $region22: #{encoder_forward.1} parent=1 // pred_check
      _
    $region23: #{encoder_forward.1} parent=1 // pred_check_branch
      %25 = sbr.rel (0) target = $region25
    $region24: #{encoder_forward.1} parent=1 // pred_region
      _
    $region25: #{encoder_forward.1} parent=1 // pred_fallthru
      _
    %v27 = vld [vmem:[%s0] sm:$0xff]
    %v28 = vld [vmem:[%s1] sm:$0xf]
    %v29 = vld [vmem:[%s1 + $0x4] sm:$0xf]
    %v30 = vld [vmem:[%s1 + $0x8] sm:$0xf]
    %v31 = vld [vmem:[%s1 + $0xc] sm:$0xf]
    %v32 = vld [vmem:[%s1 + $0x10] sm:$0xf]
    %v33 = vld [vmem:[%s1 + $0x14] sm:$0xf]
    %v34 = vld [vmem:[%s1 + $0x18] sm:$0xf]
    %v35 = vld [vmem:[%s1 + $0x1c] sm:$0xf]
    %v36 = vld [vmem:[%s1 + $0x20] sm:$0xf]
    %v37 = vld [vmem:[%s1 + $0x24] sm:$0xf]
    %v38 = vld [vmem:[%s1 + $0x28] sm:$0xf]
    %v39 = vld [vmem:[%s1 + $0x2c] sm:$0xf]
    %v40 = vld [vmem:[%s1 + $0x30] sm:$0xf]
    %v41 = vld [vmem:[%s1 + $0x34] sm:$0xf]
    %v42 = vld [vmem:[%s1 + $0x38] sm:$0xf]
    %v43 = vld [vmem:[%s1 + $0x3c] sm:$0xf]
    %v44 = vld [vmem:[%s1 + $0x40] sm:$0xf]
    %v45 = vld [vmem:[%s1 + $0x44] sm:$0xf]
    %v46 = vld [vmem:[%s1 + $0x48] sm:$0xf]
    %v47 = vld [vmem:[%s1 + $0x4c] sm:$0xf]
    %v48 = vld [vmem:[%s1 + $0x50] sm:$0xf]
    %v49 = vld [vmem:[%s1 + $0x54] sm:$0xf]
    %v50 = vld [vmem:[%s1 + $0x58] sm:$0xf]
    %v51 = vld [vmem:[%s1 + $0x5c] sm:$0xf]
    %v52 = vld [vmem:[%s1 + $0x60] sm:$0xf]
    %v53 = vld [vmem:[%s1 + $0x64] sm:$0xf]
    %v54 = vld [vmem:[%s1 + $0x68] sm:$0xf]
    %v55 = vld [vmem:[%s1 + $0x6c] sm:$0xf]
    %v56 = vld [vmem:[%s1 + $0x70] sm:$0xf]
    %v57 = vld [vmem:[%s1 + $0x74] sm:$0xf]
    %v58 = vld [vmem:[%s1 + $0x78] sm:$0xf]
    %v59 = vld [vmem:[%s1 + $0x7c] sm:$0xf]
    %v60 = vld [vmem:[%s1 + $0x80] sm:$0xf]
    %v61 = vld [vmem:[%s1 + $0x84] sm:$0xf]
    %v62 = vld [vmem:[%s1 + $0x88] sm:$0xf]
    %v63 = vld [vmem:[%s1 + $0x8c] sm:$0xf]
    %v64 = vld [vmem:[%s1 + $0x90] sm:$0xf]
    %v65 = vld [vmem:[%s1 + $0x94] sm:$0xf]
    %v66 = vld [vmem:[%s1 + $0x98] sm:$0xf]
    %v67 = vld [vmem:[%s1 + $0x9c] sm:$0xf]
    %v68 = vld [vmem:[%s1 + $0xa0] sm:$0xf]
    %v69 = vld [vmem:[%s1 + $0xa4] sm:$0xf]
    %v70 = vld [vmem:[%s1 + $0xa8] sm:$0xf]
    %v71 = vld [vmem:[%s1 + $0xac] sm:$0xf]
    %v72 = vld [vmem:[%s1 + $0xb0] sm:$0xf]
    %v73 = vld [vmem:[%s1 + $0xb4] sm:$0xf]
    %v74 = vld [vmem:[%s1 + $0xb8] sm:$0xf]
    %v75 = vld [vmem:[%s1 + $0xbc] sm:$0xf]
    %v76 = vld [vmem:[%s1 + $0xc0] sm:$0xf]
    %v77 = vld [vmem:[%s1 + $0xc4] sm:$0xf]
    %v78 = vld [vmem:[%s1 + $0xc8] sm:$0xf]
    %v79 = vld [vmem:[%s1 + $0xcc] sm:$0xf]
    %v80 = vld [vmem:[%s1 + $0xd0] sm:$0xf]
    %v81 = vld [vmem:[%s1 + $0xd4] sm:$0xf]
    %v82 = vld [vmem:[%s1 + $0xd8] sm:$0xf]
    %v83 = vld [vmem:[%s1 + $0xdc] sm:$0xf]
    %v84 = vld [vmem:[%s1 + $0xe0] sm:$0xf]
    %v85 = vld [vmem:[%s1 + $0xe4] sm:$0xf]
    %v86 = vld [vmem:[%s1 + $0xe8] sm:$0xf]
    %v87 = vld [vmem:[%s1 + $0xec] sm:$0xf]
    %v88 = vld [vmem:[%s1 + $0xf0] sm:$0xf]
    %v89 = vld [vmem:[%s1 + $0xf4] sm:$0xf]
    %v90 = vld [vmem:[%s1 + $0xf8] sm:$0xf]
    %v91 = vld [vmem:[%s1 + $0xfc] sm:$0xf]
    %v92 = vld [vmem:[%s1 + $0x100] sm:$0xf]
    %v93 = vld [vmem:[%s1 + $0x104] sm:$0xf]
    %v94 = vld [vmem:[%s1 + $0x108] sm:$0xf]
    %v95 = vld [vmem:[%s1 + $0x10c] sm:$0xf]
    %v96 = vld [vmem:[%s1 + $0x110] sm:$0xf]
    %v97 = vld [vmem:[%s1 + $0x114] sm:$0xf]
    %v98 = vld [vmem:[%s1 + $0x118] sm:$0xf]
    %v99 = vld [vmem:[%s1 + $0x11c] sm:$0xf]
    %v100 = vld [vmem:[%s1 + $0x120] sm:$0xf]
    %v101 = vld [vmem:[%s1 + $0x124] sm:$0xf]
    %v102 = vld [vmem:[%s1 + $0x128] sm:$0xf]
    %v103 = vld [vmem:[%s1 + $0x12c] sm:$0xf]
    %v104 = vld [vmem:[%s1 + $0x130] sm:$0xf]
    %v105 = vld [vmem:[%s1 + $0x134] sm:$0xf]
    %v106 = vld [vmem:[%s1 + $0x138] sm:$0xf]
    %v107 = vld [vmem:[%s1 + $0x13c] sm:$0xf]
    %v108 = vld [vmem:[%s1 + $0x140] sm:$0xf]
    %v109 = vld [vmem:[%s1 + $0x144] sm:$0xf]
    %v110 = vld [vmem:[%s1 + $0x148] sm:$0xf]
    %v111 = vld [vmem:[%s1 + $0x14c] sm:$0xf]
    %v112 = vld [vmem:[%s1 + $0x150] sm:$0xf]
    %v113 = vld [vmem:[%s1 + $0x154] sm:$0xf]
    %v114 = vld [vmem:[%s1 + $0x158] sm:$0xf]
    %v115 = vld [vmem:[%s1 + $0x15c] sm:$0xf]
    %v116 = vld [vmem:[%s1 + $0x160] sm:$0xf]
    %v117 = vld [vmem:[%s1 + $0x164] sm:$0xf]
    %v118 = vld [vmem:[%s1 + $0x168] sm:$0xf]
    %v119 = vld [vmem:[%s1 + $0x16c] sm:$0xf]
    %v120 = vld [vmem:[%s1 + $0x170] sm:$0xf]
    %v121 = vld [vmem:[%s1 + $0x174] sm:$0xf]
    %v122 = vld [vmem:[%s1 + $0x178] sm:$0xf]
    %v123 = vld [vmem:[%s1 + $0x17c] sm:$0xf]
    %v124 = vld [vmem:[%s1 + $0x180] sm:$0xf]
    %v125 = vld [vmem:[%s1 + $0x184] sm:$0xf]
    %v126 = vld [vmem:[%s1 + $0x188] sm:$0xf]
    %v127 = vld [vmem:[%s1 + $0x18c] sm:$0xf]
    %v128 = vld [vmem:[%s1 + $0x190] sm:$0xf]
    %v129 = vld [vmem:[%s1 + $0x194] sm:$0xf]
    %v130 = vld [vmem:[%s1 + $0x198] sm:$0xf]
    %v131 = vld [vmem:[%s1 + $0x19c] sm:$0xf]
    %v132 = vld [vmem:[%s1 + $0x1a0] sm:$0xf]
    %v133 = vld [vmem:[%s1 + $0x1a4] sm:$0xf]
    %v134 = vld [vmem:[%s1 + $0x1a8] sm:$0xf]
    %v135 = vld [vmem:[%s1 + $0x1ac] sm:$0xf]
    %v136 = vld [vmem:[%s1 + $0x1b0] sm:$0xf]
    %v137 = vld [vmem:[%s1 + $0x1b4] sm:$0xf]
    %v138 = vld [vmem:[%s1 + $0x1b8] sm:$0xf]
    %v139 = vld [vmem:[%s1 + $0x1bc] sm:$0xf]
    %v140 = vld [vmem:[%s1 + $0x1c0] sm:$0xf]
    %v141 = vld [vmem:[%s1 + $0x1c4] sm:$0xf]
    %v142 = vld [vmem:[%s1 + $0x1c8] sm:$0xf]
    %v143 = vld [vmem:[%s1 + $0x1cc] sm:$0xf]
    %v144 = vld [vmem:[%s1 + $0x1d0] sm:$0xf]
    %v145 = vld [vmem:[%s1 + $0x1d4] sm:$0xf]
    %v146 = vld [vmem:[%s1 + $0x1d8] sm:$0xf]
    %v147 = vld [vmem:[%s1 + $0x1dc] sm:$0xf]
    %v148 = vld [vmem:[%s1 + $0x1e0] sm:$0xf]
    %v149 = vld [vmem:[%s1 + $0x1e4] sm:$0xf]
    %v150 = vld [vmem:[%s1 + $0x1e8] sm:$0xf]
    %v151 = vld [vmem:[%s1 + $0x1ec] sm:$0xf]
    %v152 = vld [vmem:[%s1 + $0x1f0] sm:$0xf]
    %v153 = vld [vmem:[%s1 + $0x1f4] sm:$0xf]
    %v154 = vld [vmem:[%s1 + $0x1f8] sm:$0xf]
    %v155 = vld [vmem:[%s1 + $0x1fc] sm:$0xf]
    %v156 = vld [vmem:[%s2] sm:$0x1]
    %v158 = vlaneseq
    %v159 = vshrl.u32 %v158, 7
    %v160 = vsub.s32 0, %v159
    %v161 = vrot.slane %v156, %v160
    %v164 = vcombine.high %v27, %v27
    %v166 = vunpack.c.l.s4 1966171168
    %v167 = vunpack.c.0.s8 %v166
    %v168 = vlaneseq
    %v169 = vshrl.u32 %v168, 7
    %v170 = vsub.s32 %v167, %v169
    %v171 = vrot.slane %v27, %v170
    %v173 = vunpack.c.l.s4 1966171168
    %v174 = vunpack.c.0.s8 %v173
    %v175 = vlaneseq
    %v176 = vshrl.u32 %v175, 7
    %v177 = vsub.s32 %v174, %v176
    %v178 = vrot.slane %v164, %v177
    %v179 = vcombine.high %v171, %v171
    %v180 = vcombine.high %v178, %v178
    %v182 = vunpack.c.l.s4 1966171168
    %v183 = vunpack.c.0.s8 %v182
    %v184 = vlaneseq
    %v185 = vshrl.u32 %v184, 7
    %v186 = vsub.s32 %v183, %v185
    %v187 = vrot.slane %v171, %v186
    %v189 = vunpack.c.l.s4 1966171168
    %v190 = vunpack.c.0.s8 %v189
    %v191 = vlaneseq
    %v192 = vshrl.u32 %v191, 7
    %v193 = vsub.s32 %v190, %v192
    %v194 = vrot.slane %v178, %v193
    %v196 = vunpack.c.l.s4 1966171168
    %v197 = vunpack.c.0.s8 %v196
    %v198 = vlaneseq
    %v199 = vshrl.u32 %v198, 7
    %v200 = vsub.s32 %v197, %v199
    %v201 = vrot.slane %v179, %v200
    %v203 = vunpack.c.l.s4 1966171168
    %v204 = vunpack.c.0.s8 %v203
    %v205 = vlaneseq
    %v206 = vshrl.u32 %v205, 7
    %v207 = vsub.s32 %v204, %v206
    %v208 = vrot.slane %v180, %v207
    %v209 = vcombine.high %v187, %v187
    %v210 = vcombine.high %v194, %v194
    %v211 = vcombine.high %v201, %v201
    %v212 = vcombine.high %v208, %v208
    %v349 = vunpack.c.l.b16 %v28
    %v350 = vunpack.c.l.b16 %v29
    %v351 = vunpack.c.l.b16 %v30
    %v352 = vunpack.c.l.b16 %v31
    %v353 = vunpack.c.l.b16 %v32
    %v354 = vunpack.c.l.b16 %v33
    %v355 = vunpack.c.l.b16 %v34
    %v356 = vunpack.c.l.b16 %v35
    %v357 = vunpack.c.l.b16 %v36
    %v358 = vunpack.c.l.b16 %v37
    %v359 = vunpack.c.l.b16 %v38
    %v360 = vunpack.c.l.b16 %v39
    %v361 = vunpack.c.l.b16 %v40
    %v362 = vunpack.c.l.b16 %v41
    %v363 = vunpack.c.l.b16 %v42
    %v364 = vunpack.c.l.b16 %v43
    %v365 = vunpack.c.l.b16 %v44
    %v366 = vunpack.c.l.b16 %v45
    %v367 = vunpack.c.l.b16 %v46
    %v368 = vunpack.c.l.b16 %v47
    %v369 = vunpack.c.l.b16 %v48
    %v370 = vunpack.c.l.b16 %v49
    %v371 = vunpack.c.l.b16 %v50
    %v372 = vunpack.c.l.b16 %v51
    %v373 = vunpack.c.l.b16 %v52
    %v374 = vunpack.c.l.b16 %v53
    %v375 = vunpack.c.l.b16 %v54
    %v376 = vunpack.c.l.b16 %v55
    %v377 = vunpack.c.l.b16 %v56
    %v378 = vunpack.c.l.b16 %v57
    %v379 = vunpack.c.l.b16 %v58
    %v380 = vunpack.c.l.b16 %v59
    %v381 = vunpack.c.l.b16 %v60
    %v382 = vunpack.c.l.b16 %v61
    %v383 = vunpack.c.l.b16 %v62
    %v384 = vunpack.c.l.b16 %v63
    %v385 = vunpack.c.l.b16 %v64
    %v386 = vunpack.c.l.b16 %v65
    %v387 = vunpack.c.l.b16 %v66
    %v388 = vunpack.c.l.b16 %v67
    %v389 = vunpack.c.l.b16 %v68
    %v390 = vunpack.c.l.b16 %v69
    %v391 = vunpack.c.l.b16 %v70
    %v392 = vunpack.c.l.b16 %v71
    %v393 = vunpack.c.l.b16 %v72
    %v394 = vunpack.c.l.b16 %v73
    %v395 = vunpack.c.l.b16 %v74
    %v396 = vunpack.c.l.b16 %v75
    %v397 = vunpack.c.l.b16 %v76
    %v398 = vunpack.c.l.b16 %v77
    %v399 = vunpack.c.l.b16 %v78
    %v400 = vunpack.c.l.b16 %v79
    %v401 = vunpack.c.l.b16 %v80
    %v402 = vunpack.c.l.b16 %v81
    %v403 = vunpack.c.l.b16 %v82
    %v404 = vunpack.c.l.b16 %v83
    %v405 = vunpack.c.l.b16 %v84
    %v406 = vunpack.c.l.b16 %v85
    %v407 = vunpack.c.l.b16 %v86
    %v408 = vunpack.c.l.b16 %v87
    %v409 = vunpack.c.l.b16 %v88
    %v410 = vunpack.c.l.b16 %v89
    %v411 = vunpack.c.l.b16 %v90
    %v412 = vunpack.c.l.b16 %v91
    %v413 = vunpack.c.l.b16 %v92
    %v414 = vunpack.c.l.b16 %v93
    %v415 = vunpack.c.l.b16 %v94
    %v416 = vunpack.c.l.b16 %v95
    %v417 = vunpack.c.l.b16 %v96
    %v418 = vunpack.c.l.b16 %v97
    %v419 = vunpack.c.l.b16 %v98
    %v420 = vunpack.c.l.b16 %v99
    %v421 = vunpack.c.l.b16 %v100
    %v422 = vunpack.c.l.b16 %v101
    %v423 = vunpack.c.l.b16 %v102
    %v424 = vunpack.c.l.b16 %v103
    %v425 = vunpack.c.l.b16 %v104
    %v426 = vunpack.c.l.b16 %v105
    %v427 = vunpack.c.l.b16 %v106
    %v428 = vunpack.c.l.b16 %v107
    %v429 = vunpack.c.l.b16 %v108
    %v430 = vunpack.c.l.b16 %v109
    %v431 = vunpack.c.l.b16 %v110
    %v432 = vunpack.c.l.b16 %v111
    %v433 = vunpack.c.l.b16 %v112
    %v434 = vunpack.c.l.b16 %v113
    %v435 = vunpack.c.l.b16 %v114
    %v436 = vunpack.c.l.b16 %v115
    %v437 = vunpack.c.l.b16 %v116
    %v438 = vunpack.c.l.b16 %v117
    %v439 = vunpack.c.l.b16 %v118
    %v440 = vunpack.c.l.b16 %v119
    %v441 = vunpack.c.l.b16 %v120
    %v442 = vunpack.c.l.b16 %v121
    %v443 = vunpack.c.l.b16 %v122
    %v444 = vunpack.c.l.b16 %v123
    %v445 = vunpack.c.l.b16 %v124
    %v446 = vunpack.c.l.b16 %v125
    %v447 = vunpack.c.l.b16 %v126
    %v448 = vunpack.c.l.b16 %v127
    %v449 = vunpack.c.l.b16 %v128
    %v450 = vunpack.c.l.b16 %v129
    %v451 = vunpack.c.l.b16 %v130
    %v452 = vunpack.c.l.b16 %v131
    %v453 = vunpack.c.l.b16 %v132
    %v454 = vunpack.c.l.b16 %v133
    %v455 = vunpack.c.l.b16 %v134
    %v456 = vunpack.c.l.b16 %v135
    %v457 = vunpack.c.l.b16 %v136
    %v458 = vunpack.c.l.b16 %v137
    %v459 = vunpack.c.l.b16 %v138
    %v460 = vunpack.c.l.b16 %v139
    %v461 = vunpack.c.l.b16 %v140
    %v462 = vunpack.c.l.b16 %v141
    %v463 = vunpack.c.l.b16 %v142
    %v464 = vunpack.c.l.b16 %v143
    %v465 = vunpack.c.l.b16 %v144
    %v466 = vunpack.c.l.b16 %v145
    %v467 = vunpack.c.l.b16 %v146
    %v468 = vunpack.c.l.b16 %v147
    %v469 = vunpack.c.l.b16 %v148
    %v470 = vunpack.c.l.b16 %v149
    %v471 = vunpack.c.l.b16 %v150
    %v472 = vunpack.c.l.b16 %v151
    %v473 = vunpack.c.l.b16 %v152
    %v474 = vunpack.c.l.b16 %v153
    %v475 = vunpack.c.l.b16 %v154
    %v476 = vunpack.c.l.b16 %v155
    %v477 = vpack.c.b16 %v350, %v349
    %v478 = vpack.c.b16 %v352, %v351
    %v479 = vpack.c.b16 %v354, %v353
    %v480 = vpack.c.b16 %v356, %v355
    %v481 = vpack.c.b16 %v358, %v357
    %v482 = vpack.c.b16 %v360, %v359
    %v483 = vpack.c.b16 %v362, %v361
    %v484 = vpack.c.b16 %v364, %v363
    %v485 = vpack.c.b16 %v366, %v365
    %v486 = vpack.c.b16 %v368, %v367
    %v487 = vpack.c.b16 %v370, %v369
    %v488 = vpack.c.b16 %v372, %v371
    %v489 = vpack.c.b16 %v374, %v373
    %v490 = vpack.c.b16 %v376, %v375
    %v491 = vpack.c.b16 %v378, %v377
    %v492 = vpack.c.b16 %v380, %v379
    %v493 = vpack.c.b16 %v382, %v381
    %v494 = vpack.c.b16 %v384, %v383
    %v495 = vpack.c.b16 %v386, %v385
    %v496 = vpack.c.b16 %v388, %v387
    %v497 = vpack.c.b16 %v390, %v389
    %v498 = vpack.c.b16 %v392, %v391
    %v499 = vpack.c.b16 %v394, %v393
    %v500 = vpack.c.b16 %v396, %v395
    %v501 = vpack.c.b16 %v398, %v397
    %v502 = vpack.c.b16 %v400, %v399
    %v503 = vpack.c.b16 %v402, %v401
    %v504 = vpack.c.b16 %v404, %v403
    %v505 = vpack.c.b16 %v406, %v405
    %v506 = vpack.c.b16 %v408, %v407
    %v507 = vpack.c.b16 %v410, %v409
    %v508 = vpack.c.b16 %v412, %v411
    %v509 = vpack.c.b16 %v414, %v413
    %v510 = vpack.c.b16 %v416, %v415
    %v511 = vpack.c.b16 %v418, %v417
    %v512 = vpack.c.b16 %v420, %v419
    %v513 = vpack.c.b16 %v422, %v421
    %v514 = vpack.c.b16 %v424, %v423
    %v515 = vpack.c.b16 %v426, %v425
    %v516 = vpack.c.b16 %v428, %v427
    %v517 = vpack.c.b16 %v430, %v429
    %v518 = vpack.c.b16 %v432, %v431
    %v519 = vpack.c.b16 %v434, %v433
    %v520 = vpack.c.b16 %v436, %v435
    %v521 = vpack.c.b16 %v438, %v437
    %v522 = vpack.c.b16 %v440, %v439
    %v523 = vpack.c.b16 %v442, %v441
    %v524 = vpack.c.b16 %v444, %v443
    %v525 = vpack.c.b16 %v446, %v445
    %v526 = vpack.c.b16 %v448, %v447
    %v527 = vpack.c.b16 %v450, %v449
    %v528 = vpack.c.b16 %v452, %v451
    %v529 = vpack.c.b16 %v454, %v453
    %v530 = vpack.c.b16 %v456, %v455
    %v531 = vpack.c.b16 %v458, %v457
    %v532 = vpack.c.b16 %v460, %v459
    %v533 = vpack.c.b16 %v462, %v461
    %v534 = vpack.c.b16 %v464, %v463
    %v535 = vpack.c.b16 %v466, %v465
    %v536 = vpack.c.b16 %v468, %v467
    %v537 = vpack.c.b16 %v470, %v469
    %v538 = vpack.c.b16 %v472, %v471
    %v539 = vpack.c.b16 %v474, %v473
    %v540 = vpack.c.b16 %v476, %v475
    %605 = vmatprep.subr.bf16.mxu0 0
    %606 = vmatpush1.bf16.msra.mxu0 %v477
    %607 = vmatprep.subr.bf16.mxu0 0
    %608 = vmatpush1.bf16.msra.mxu0 %v478
    %609 = vmatprep.subr.bf16.mxu0 0
    %610 = vmatpush1.bf16.msra.mxu0 %v479
    %611 = vmatprep.subr.bf16.mxu0 0
    %612 = vmatpush1.bf16.msra.mxu0 %v480
    %613 = vmatprep.subr.bf16.mxu0 0
    %614 = vmatpush1.bf16.msra.mxu0 %v481
    %615 = vmatprep.subr.bf16.mxu0 0
    %616 = vmatpush1.bf16.msra.mxu0 %v482
    %617 = vmatprep.subr.bf16.mxu0 0
    %618 = vmatpush1.bf16.msra.mxu0 %v483
    %619 = vmatprep.subr.bf16.mxu0 0
    %620 = vmatpush1.bf16.msra.mxu0 %v484
    %621 = vmatprep.subr.bf16.mxu0 0
    %622 = vmatpush1.bf16.msra.mxu0 %v485
    %623 = vmatprep.subr.bf16.mxu0 0
    %624 = vmatpush1.bf16.msra.mxu0 %v486
    %625 = vmatprep.subr.bf16.mxu0 0
    %626 = vmatpush1.bf16.msra.mxu0 %v487
    %627 = vmatprep.subr.bf16.mxu0 0
    %628 = vmatpush1.bf16.msra.mxu0 %v488
    %629 = vmatprep.subr.bf16.mxu0 0
    %630 = vmatpush1.bf16.msra.mxu0 %v489
    %631 = vmatprep.subr.bf16.mxu0 0
    %632 = vmatpush1.bf16.msra.mxu0 %v490
    %633 = vmatprep.subr.bf16.mxu0 0
    %634 = vmatpush1.bf16.msra.mxu0 %v491
    %635 = vmatprep.subr.bf16.mxu0 0
    %636 = vmatpush1.bf16.msra.mxu0 %v492
    %637 = vmatprep.mubr.bf16.mxu0 %v201
    %638 = vmatmul.mubr.bf16.gmra.mrb[0].mxu0 %v187
    %v639 = vpop.f32.mrb[0].mxu0
    %v640 = vadd.f32 %v161, %v639
    %v641 = vpop.f32.mrb[0].mxu0
    %v642 = vpop.f32.mrb[0].mxu0
    %v643 = vpop.f32.mrb[0].mxu0
    %644 = vdwg.mxu0
    %645 = vmatprep.subr.bf16.mxu0 0
    %646 = vmatpush1.bf16.msra.mxu0 %v493
    %647 = vmatprep.subr.bf16.mxu0 0
    %648 = vmatpush1.bf16.msra.mxu0 %v494
    %649 = vmatprep.subr.bf16.mxu0 0
    %650 = vmatpush1.bf16.msra.mxu0 %v495
    %651 = vmatprep.subr.bf16.mxu0 0
    %652 = vmatpush1.bf16.msra.mxu0 %v496
    %653 = vmatprep.subr.bf16.mxu0 0
    %654 = vmatpush1.bf16.msra.mxu0 %v497
    %655 = vmatprep.subr.bf16.mxu0 0
    %656 = vmatpush1.bf16.msra.mxu0 %v498
    %657 = vmatprep.subr.bf16.mxu0 0
    %658 = vmatpush1.bf16.msra.mxu0 %v499
    %659 = vmatprep.subr.bf16.mxu0 0
    %660 = vmatpush1.bf16.msra.mxu0 %v500
    %661 = vmatprep.subr.bf16.mxu0 0
    %662 = vmatpush1.bf16.msra.mxu0 %v501
    %663 = vmatprep.subr.bf16.mxu0 0
    %664 = vmatpush1.bf16.msra.mxu0 %v502
    %665 = vmatprep.subr.bf16.mxu0 0
    %666 = vmatpush1.bf16.msra.mxu0 %v503
    %667 = vmatprep.subr.bf16.mxu0 0
    %668 = vmatpush1.bf16.msra.mxu0 %v504
    %669 = vmatprep.subr.bf16.mxu0 0
    %670 = vmatpush1.bf16.msra.mxu0 %v505
    %671 = vmatprep.subr.bf16.mxu0 0
    %672 = vmatpush1.bf16.msra.mxu0 %v506
    %673 = vmatprep.subr.bf16.mxu0 0
    %674 = vmatpush1.bf16.msra.mxu0 %v507
    %675 = vmatprep.subr.bf16.mxu0 0
    %676 = vmatpush1.bf16.msra.mxu0 %v508
    %677 = vmatprep.mubr.bf16.mxu0 %v211
    %678 = vmatmul.mubr.bf16.gmra.mrb[0].mxu0 %v209
    %v679 = vpop.f32.mrb[0].mxu0
    %v680 = vadd.f32 %v640, %v679
    %v681 = vpop.f32.mrb[0].mxu0
    %v682 = vpop.f32.mrb[0].mxu0
    %v683 = vpop.f32.mrb[0].mxu0
    %684 = vdwg.mxu0
    %685 = vmatprep.subr.bf16.mxu0 0
    %686 = vmatpush1.bf16.msra.mxu0 %v509
    %687 = vmatprep.subr.bf16.mxu0 0
    %688 = vmatpush1.bf16.msra.mxu0 %v510
    %689 = vmatprep.subr.bf16.mxu0 0
    %690 = vmatpush1.bf16.msra.mxu0 %v511
    %691 = vmatprep.subr.bf16.mxu0 0
    %692 = vmatpush1.bf16.msra.mxu0 %v512
    %693 = vmatprep.subr.bf16.mxu0 0
    %694 = vmatpush1.bf16.msra.mxu0 %v513
    %695 = vmatprep.subr.bf16.mxu0 0
    %696 = vmatpush1.bf16.msra.mxu0 %v514
    %697 = vmatprep.subr.bf16.mxu0 0
    %698 = vmatpush1.bf16.msra.mxu0 %v515
    %699 = vmatprep.subr.bf16.mxu0 0
    %700 = vmatpush1.bf16.msra.mxu0 %v516
    %701 = vmatprep.subr.bf16.mxu0 0
    %702 = vmatpush1.bf16.msra.mxu0 %v517
    %703 = vmatprep.subr.bf16.mxu0 0
    %704 = vmatpush1.bf16.msra.mxu0 %v518
    %705 = vmatprep.subr.bf16.mxu0 0
    %706 = vmatpush1.bf16.msra.mxu0 %v519
    %707 = vmatprep.subr.bf16.mxu0 0
    %708 = vmatpush1.bf16.msra.mxu0 %v520
    %709 = vmatprep.subr.bf16.mxu0 0
    %710 = vmatpush1.bf16.msra.mxu0 %v521
    %711 = vmatprep.subr.bf16.mxu0 0
    %712 = vmatpush1.bf16.msra.mxu0 %v522
    %713 = vmatprep.subr.bf16.mxu0 0
    %714 = vmatpush1.bf16.msra.mxu0 %v523
    %715 = vmatprep.subr.bf16.mxu0 0
    %716 = vmatpush1.bf16.msra.mxu0 %v524
    %717 = vmatprep.mubr.bf16.mxu0 %v208
    %718 = vmatmul.mubr.bf16.gmra.mrb[0].mxu0 %v194
    %v719 = vpop.f32.mrb[0].mxu0
    %v720 = vadd.f32 %v680, %v719
    %v721 = vpop.f32.mrb[0].mxu0
    %v722 = vpop.f32.mrb[0].mxu0
    %v723 = vpop.f32.mrb[0].mxu0
    %724 = vdwg.mxu0
    %725 = vmatprep.subr.bf16.mxu0 0
    %726 = vmatpush1.bf16.msra.mxu0 %v525
    %727 = vmatprep.subr.bf16.mxu0 0
    %728 = vmatpush1.bf16.msra.mxu0 %v526
    %729 = vmatprep.subr.bf16.mxu0 0
    %730 = vmatpush1.bf16.msra.mxu0 %v527
    %731 = vmatprep.subr.bf16.mxu0 0
    %732 = vmatpush1.bf16.msra.mxu0 %v528
    %733 = vmatprep.subr.bf16.mxu0 0
    %734 = vmatpush1.bf16.msra.mxu0 %v529
    %735 = vmatprep.subr.bf16.mxu0 0
    %736 = vmatpush1.bf16.msra.mxu0 %v530
    %737 = vmatprep.subr.bf16.mxu0 0
    %738 = vmatpush1.bf16.msra.mxu0 %v531
    %739 = vmatprep.subr.bf16.mxu0 0
    %740 = vmatpush1.bf16.msra.mxu0 %v532
    %741 = vmatprep.subr.bf16.mxu0 0
    %742 = vmatpush1.bf16.msra.mxu0 %v533
    %743 = vmatprep.subr.bf16.mxu0 0
    %744 = vmatpush1.bf16.msra.mxu0 %v534
    %745 = vmatprep.subr.bf16.mxu0 0
    %746 = vmatpush1.bf16.msra.mxu0 %v535
    %747 = vmatprep.subr.bf16.mxu0 0
    %748 = vmatpush1.bf16.msra.mxu0 %v536
    %749 = vmatprep.subr.bf16.mxu0 0
    %750 = vmatpush1.bf16.msra.mxu0 %v537
    %751 = vmatprep.subr.bf16.mxu0 0
    %752 = vmatpush1.bf16.msra.mxu0 %v538
    %753 = vmatprep.subr.bf16.mxu0 0
    %754 = vmatpush1.bf16.msra.mxu0 %v539
    %755 = vmatprep.subr.bf16.mxu0 0
    %756 = vmatpush1.bf16.msra.mxu0 %v540
    %757 = vmatprep.mubr.bf16.mxu0 %v212
    %758 = vmatmul.mubr.bf16.gmra.mrb[0].mxu0 %v210
    %v759 = vpop.f32.mrb[0].mxu0
    %v760 = vadd.f32 %v720, %v759
    %v761 = vpop.f32.mrb[0].mxu0
    %v762 = vpop.f32.mrb[0].mxu0
    %v763 = vpop.f32.mrb[0].mxu0
    %764 = vdwg.mxu0
    %v765 = vmax.f32 %v760, 0.0
    %v766 = vpack.c.bf16 %v765, %v765
    %v767 = vld [vmem:[%s3] sm:$0xf]
    %v768 = vld [vmem:[%s3 + $0x4] sm:$0xf]
    %v769 = vld [vmem:[%s3 + $0x8] sm:$0xf]
    %v770 = vld [vmem:[%s3 + $0xc] sm:$0xf]
    %v771 = vld [vmem:[%s4] sm:$0x1]
    %v773 = vlaneseq
    %v774 = vshrl.u32 %v773, 7
    %v775 = vsub.s32 0, %v774
    %v776 = vrot.slane %v771, %v775
    %v782 = vunpack.c.l.b16 %v767
    %v783 = vunpack.c.l.b16 %v768
    %v784 = vunpack.c.l.b16 %v769
    %v785 = vunpack.c.l.b16 %v770
    %v786 = vpack.c.b16 %v783, %v782
    %v787 = vpack.c.b16 %v785, %v784
    %vm790 = vcmask 261120
    %v792 = vsel %vm790, %v766, 0
    %794 = vmatprep.subr.bf16.mxu0 0
    %795 = vmatpush1.bf16.msra.mxu0 %v786
    %796 = vmatprep.subr.bf16.mxu0 0
    %797 = vmatpush1.bf16.msra.mxu0 %v787
    %798 = vmatprep.subr.bf16.mxu0 0
    %799 = vmatpush1.bf16.msra.mxu0 0
    %800 = vmatprep.subr.bf16.mxu0 0
    %801 = vmatpush1.bf16.msra.mxu0 0
    %802 = vmatprep.subr.bf16.mxu0 0
    %803 = vmatpush1.bf16.msra.mxu0 0
    %804 = vmatprep.subr.bf16.mxu0 0
    %805 = vmatpush1.bf16.msra.mxu0 0
    %806 = vmatprep.subr.bf16.mxu0 0
    %807 = vmatpush1.bf16.msra.mxu0 0
    %808 = vmatprep.subr.bf16.mxu0 0
    %809 = vmatpush1.bf16.msra.mxu0 0
    %810 = vmatprep.subr.bf16.mxu0 0
    %811 = vmatpush1.bf16.msra.mxu0 0
    %812 = vmatprep.subr.bf16.mxu0 0
    %813 = vmatpush1.bf16.msra.mxu0 0
    %814 = vmatprep.subr.bf16.mxu0 0
    %815 = vmatpush1.bf16.msra.mxu0 0
    %816 = vmatprep.subr.bf16.mxu0 0
    %817 = vmatpush1.bf16.msra.mxu0 0
    %818 = vmatprep.subr.bf16.mxu0 0
    %819 = vmatpush1.bf16.msra.mxu0 0
    %820 = vmatprep.subr.bf16.mxu0 0
    %821 = vmatpush1.bf16.msra.mxu0 0
    %822 = vmatprep.subr.bf16.mxu0 0
    %823 = vmatpush1.bf16.msra.mxu0 0
    %824 = vmatprep.subr.bf16.mxu0 0
    %825 = vmatpush1.bf16.msra.mxu0 0
    %826 = vmatprep.mubr.bf16.mxu0 0
    %827 = vmatmul.mubr.bf16.gmra.mrb[0].mxu0 %v792
    %v828 = vpop.f32.mrb[0].mxu0
    %v829 = vadd.f32 %v776, %v828
    %v830 = vpop.f32.mrb[0].mxu0
    %v831 = vpop.f32.mrb[0].mxu0
    %v832 = vpop.f32.mrb[0].mxu0
    %833 = vdwg.mxu0
    %vm834 = vcmask 156672
    %835 = vst.msk [vmem:[#allocation2] sm:$0x3] %vm834, %v829
    %v836 = vmul.f32 %v829, 0.5
    %v837 = vmul.f32 %v836, 1.442695
    %v838 = vpow.pop %v837
    %v841 = vunpack.c.l.s4 1966171168
    %v842 = vunpack.c.0.s8 %v841
    %v843 = vlaneseq
    %v844 = vshrl.u32 %v843, 7
    %v845 = vsub.s32 %v842, %v844
    %v846 = vrot.slane %v829, %v845
    %v847 = vcombine.high %v846, %v846
    %v849 = vunpack.c.l.s4 1966171168
    %v850 = vunpack.c.0.s8 %v849
    %v851 = vlaneseq
    %v852 = vshrl.u32 %v851, 7
    %v853 = vsub.s32 %v850, %v852
    %v854 = vrot.slane %v846, %v853
    %v856 = vunpack.c.l.s4 1966171168
    %v857 = vunpack.c.0.s8 %v856
    %v858 = vlaneseq
    %v859 = vshrl.u32 %v858, 7
    %v860 = vsub.s32 %v857, %v859
    %v861 = vrot.slane %v847, %v860
    %v862 = vlaneseq
    %v863 = vshrl.u32 %v862, 7
    %v864 = vsub.s32 0, %v863
    %v865 = vrot.slane %v854, %v864
    %v866 = vlaneseq
    %v867 = vshrl.u32 %v866, 7
    %v868 = vsub.s32 0, %v867
    %v869 = vrot.slane %v861, %v868
    %v874 = vunpack.c.l.s4 1966171168
    %v875 = vunpack.c.0.s8 %v874
    %v876 = vlaneseq
    %v877 = vshrl.u32 %v876, 7
    %v878 = vsub.s32 %v875, %v877
    %v879 = vrot.slane %v838, %v878
    %v880 = vcombine.high %v879, %v879
    %v882 = vunpack.c.l.s4 1966171168
    %v883 = vunpack.c.0.s8 %v882
    %v884 = vlaneseq
    %v885 = vshrl.u32 %v884, 7
    %v886 = vsub.s32 %v883, %v885
    %v887 = vrot.slane %v879, %v886
    %v889 = vunpack.c.l.s4 1966171168
    %v890 = vunpack.c.0.s8 %v889
    %v891 = vlaneseq
    %v892 = vshrl.u32 %v891, 7
    %v893 = vsub.s32 %v890, %v892
    %v894 = vrot.slane %v880, %v893
    %v895 = vlaneseq
    %v896 = vshrl.u32 %v895, 7
    %v897 = vsub.s32 0, %v896
    %v898 = vrot.slane %v887, %v897
    %v899 = vlaneseq
    %v900 = vshrl.u32 %v899, 7
    %v901 = vsub.s32 0, %v900
    %v902 = vrot.slane %v894, %v901
    %v905 = vld [vmem:[%s5] sm:$0x3f]
    %v906 = vld [vmem:[%s5 + $0x8] sm:$0x3f]
    %909 = vrot.lane.b32.xlu0 %v905, 10
    %v910 = vpop.permute.xlu0 %909
    %911 = vrot.lane.b32.xlu0 %v906, 10
    %v912 = vpop.permute.xlu0 %911
    %v915 = vmul.f32 %v898, %v910
    %v916 = vmul.f32 %v902, %v912
    %919 = vrot.lane.b32.xlu0 %v915, 118
    %v920 = vpop.permute.xlu0 %919
    %921 = vrot.lane.b32.xlu0 %v916, 118
    %v922 = vpop.permute.xlu0 %921
    %v925 = vadd.f32 %v865, %v920
    %v926 = vadd.f32 %v869, %v922
    %927 = vrot.lane.b32.xlu0 %v865, 10
    %v928 = vpop.permute.xlu0 %927
    %929 = vrot.lane.b32.xlu0 %v869, 10
    %v930 = vpop.permute.xlu0 %929
    %933 = vrot.lane.b32.xlu0 %v898, 10
    %v934 = vpop.permute.xlu0 %933
    %935 = vrot.lane.b32.xlu0 %v902, 10
    %v936 = vpop.permute.xlu0 %935
    %vm939 = vcmask 80896
    %v940 = vsel %vm939, %v925, %v928
    %v941 = vsel %vm939, %v926, %v930
    %vm942 = vcmask 162816
    %v943 = vsel %vm942, %v940, %v934
    %v944 = vsel %vm942, %v941, %v936
    %vm945 = vcmask 242688
    %946 = vst.msk [vmem:[%s7] sm:$0x3f] %vm945, %v943
    %947 = vst.msk [vmem:[%s7 + $0x8] sm:$0x3f] %vm945, %v944
    // Predicated region
    $region26: #{encoder_forward.1} parent=1 // pred_check
      _
    $region27: #{encoder_forward.1} parent=1 // pred_check_branch
      %949 = sbr.rel (0) target = $region29
    $region28: #{encoder_forward.1} parent=1 // pred_region
      %s951 = ssub.s32 32, 32
      %952 = vsyncadd [#allocation3], %s951
      %s954 = sshll.u32 [#allocation2], 4
      %s955 = int_to_ptr.vmem [resolvable:$true] %s954
      %957 = dma.vmem_to_hbm [thread:$0]  %s955, 32, %s6, [#allocation3]
    $region29: #{encoder_forward.1} parent=1 // pred_fallthru
      _
    // Predicated region
    $region30: #{encoder_forward.1} parent=1 // pred_check
      _
    $region31: #{encoder_forward.1} parent=1 // pred_check_branch
      %959 = sbr.rel (0) target = $region33
    $region32: #{encoder_forward.1} parent=1 // pred_region
      _
    $region33: #{encoder_forward.1} parent=1 // pred_fallthru
      _
    // Predicated region
    $region34: #{encoder_forward.1} parent=1 // pred_check
      _
    $region35: #{encoder_forward.1} parent=1 // pred_check_branch
      %961 = sbr.rel (0) target = $region37
    $region36: #{encoder_forward.1} parent=1 // pred_region
      %962 = dma.done [#allocation3], 32
    $region37: #{encoder_forward.1} parent=1 // pred_fallthru
      _
    // Predicated region
    $region38: #{encoder_forward.1} parent=1 // pred_check
      _
    $region39: #{encoder_forward.1} parent=1 // pred_check_branch
      %964 = sbr.rel (0) target = $region41
    $region40: #{encoder_forward.1} parent=1 // pred_region
      _
    $region41: #{encoder_forward.1} parent=1 // pred_fallthru
      _
    %965 = vsyncpa [#allocation3], 1

</llo_original>
